<compile_context>
chip_gen: v6e
topology: v6e:2x2x1
jax: 0.10.0
libtpu: 0.0.40
codegen_flags: <defaults>
</compile_context>

<pallas_src>
import numpy as np
import jax
import jax.numpy as jnp
from jax.experimental import pallas as pl
from jax.experimental.pallas import tpu as pltpu


def _avgpool_matmul_kernel(x_ref, pw_ref, o_ref):
    # x_ref:  (Cb, H*W)    channel rows, flattened spatial on lanes
    # pw_ref: (H*W, Ho*Wo) constant pooling matrix (four 0.25 taps per column)
    # o_ref:  (Cb, Ho*Wo)  lane-dense output slab
    o_ref[...] = jnp.dot(
        x_ref[...].astype(jnp.float32),
        pw_ref[...],
        preferred_element_type=jnp.float32,
    ).astype(o_ref.dtype)


def _build_pool_matrix(h, w):
    """(H*W, Ho*Wo) matrix: column (ho*Wo+wo) has 0.25 at its four 2x2 taps."""
    ho, wo = h // 2, w // 2
    idx = np.arange(h * w)
    r, c = idx // w, idx % w
    cols = (r // 2) * wo + (c // 2)
    pw = np.zeros((h * w, ho * wo), np.float32)
    pw[idx, cols] = 0.25
    return pw


@jax.jit
def avg_pool2d_2x2(x_nchw):
    """AvgPool2d(kernel_size=2, stride=2, padding=0), PyTorch NCHW semantics."""
    n, c, h, w = x_nchw.shape
    assert h % 2 == 0 and w % 2 == 0, "2x2/stride-2 pooling needs even H, W"
    ho, wo = h // 2, w // 2

    rows = n * c
    x2d = x_nchw.reshape(rows, h * w)            # free view: no transpose
    pw = jnp.asarray(_build_pool_matrix(h, w))   # compile-time constant

    # Channel blocking: 2 balanced blocks (896 -> 2 x 448).  One block per
    # TensorCore on v7x; on single-TC chips the second step is ~0.35 us of
    # overhead on a ~1 us kernel.  Fall back to a single block otherwise.
    if rows % 2 == 0 and (rows // 2) % 8 == 0:
        cb = rows // 2
    else:
        cb = rows
    grid = (rows // cb,)

    itemsize = jnp.dtype(x_nchw.dtype).itemsize
    cost = pl.CostEstimate(
        flops=4 * rows * ho * wo,                        # 3 adds + 1 mul / output
        transcendentals=0,
        bytes_accessed=(rows * h * w + rows * ho * wo) * itemsize
                       + h * w * ho * wo * 4)

    out2d = pl.pallas_call(
        _avgpool_matmul_kernel,
        out_shape=jax.ShapeDtypeStruct((rows, ho * wo), x_nchw.dtype),
        grid=grid,
        in_specs=[
            pl.BlockSpec((cb, h * w), lambda i: (i, 0)),
            pl.BlockSpec((h * w, ho * wo), lambda i: (0, 0)),
        ],
        out_specs=pl.BlockSpec((cb, ho * wo), lambda i: (i, 0)),
        compiler_params=pltpu.CompilerParams(
            dimension_semantics=("parallel",)),
        cost_estimate=cost,
    )(x2d, pw)

    return out2d.reshape(n, c, ho, wo)           # free view back to NCHW


if __name__ == "__main__":
    key = jax.random.PRNGKey(0)
    # Shape implied by the module: (1, 896, 14, 14), float32 (torch.randn).
    x = jax.random.normal(key, (1, 896, 14, 14), dtype=jnp.float32)

    out = jax.block_until_ready(avg_pool2d_2x2(x))

    # Pure-JAX reference for the same semantics.
    n, c, h, w = x.shape
    ref = x.reshape(n, c, h // 2, 2, w // 2, 2).mean(axis=(3, 5))

    assert out.shape == (1, 896, 7, 7), out.shape
    assert out.dtype == jnp.float32, out.dtype
    assert jnp.allclose(out, ref, atol=1e-5, rtol=1e-5)
    print("KERNEL_OK")
</pallas_src>

<mosaic_0001>
module attributes {stable_mosaic.version = 11 : i64} {
  func.func @_avgpool_matmul_kernel(%arg0: i32, %arg1: memref<448x196xf32, #tpu.memory_space<vmem>>, %arg2: memref<196x49xf32, #tpu.memory_space<vmem>>, %arg3: memref<448x49xf32, #tpu.memory_space<vmem>>) attributes {dimension_semantics = [#tpu.dimension_semantics<parallel>], iteration_bounds = array<i64: 2>, scalar_prefetch = 0 : i64, scratch_operands = 0 : i64, tpu.core_type = #tpu.core_type<tc>, window_params = [{transform_indices = @transform_0, window_bounds = array<i64: 448, 196>}, {pipeline_mode = #tpu.pipeline_mode<synchronous>, transform_indices = @transform_1, window_bounds = array<i64: 196, 49>}, {transform_indices = @transform_2, window_bounds = array<i64: 448, 49>}]} {
    %c0 = arith.constant 0 : index
    %c0_0 = arith.constant 0 : index
    %0 = vector.load %arg1[%c0, %c0_0] : memref<448x196xf32, #tpu.memory_space<vmem>>, vector<448x196xf32>
    %c0_1 = arith.constant 0 : index
    %c0_2 = arith.constant 0 : index
    %1 = vector.load %arg2[%c0_1, %c0_2] : memref<196x49xf32, #tpu.memory_space<vmem>>, vector<196x49xf32>
    %cst = arith.constant dense<0.000000e+00> : vector<448x49xf32>
    %2 = tpu.matmul %0, %1, %cst {dimension_numbers = #tpu.dot_dimension_numbers<[1], [0], [0], [1], [0, 0, 1, 1], [], []>} : vector<448x196xf32>, vector<196x49xf32>, vector<448x49xf32> -> vector<448x49xf32>
    %c0_3 = arith.constant 0 : index
    %c0_4 = arith.constant 0 : index
    %3 = vector.load %arg3[%c0_3, %c0_4] : memref<448x49xf32, #tpu.memory_space<vmem>>, vector<448x49xf32>
    tpu.vector_store %arg3[%c0_3, %c0_4], %2 {strides = array<i32>} : memref<448x49xf32, #tpu.memory_space<vmem>>, vector<448x49xf32>,
    return
  }
  func.func @transform_0(%arg0: i32) -> (i32, i32) {
    %c0_i32 = arith.constant 0 : i32
    %c0_i32_0 = arith.constant 0 : i32
    return %arg0, %c0_i32 : i32, i32
  }
  func.func @transform_1(%arg0: i32) -> (i32, i32) {
    %c0_i32 = arith.constant 0 : i32
    %c0_i32_0 = arith.constant 0 : i32
    %c0_i32_1 = arith.constant 0 : i32
    return %c0_i32, %c0_i32_0 : i32, i32
  }
  func.func @transform_2(%arg0: i32) -> (i32, i32) {
    %c0_i32 = arith.constant 0 : i32
    %c0_i32_0 = arith.constant 0 : i32
    return %arg0, %c0_i32 : i32, i32
  }
}

</mosaic_0001>

<llo_original>
// kernel: avg_pool2d_2x2.1
$region0: #{avg_pool2d_2x2.1}
  #allocation0 [shape = 'u32[]', space=smem, size = 0x4, offset = 0x4, fixed_abs, tag = 'smem constant byte address 0x4 - core index']
  #allocation1 [shape = 'u32[144,128]{1,0:T(1,128)}', space=vmem, size = 0x12000, scoped, tag = 'internal scratch']
  %s0 = inlined_call_operand.vmem [shape: f32[896,196], index: 0, kind: input, shape index: {}]
  %s1 = inlined_call_operand.vmem [shape: f32[196,49], index: 1, kind: input, shape index: {}]
  %s2 = inlined_call_operand.vmem [shape: f32[896,49], index: 2, kind: output, shape index: {}]
  %s3 = sld [smem:[#allocation0]]
  $region41: #{avg_pool2d_2x2.1} parent=0
    _
  %s5 = ssub.s32 1, %s3
  %s6 = scalar_select 0, %s5, %s3
  loop: start=0, step=1, limit=4
  $region2: #{avg_pool2d_2x2.1} parent=0 // loop_pre_header
    _
  $region3: #{avg_pool2d_2x2.1} parent=0 // loop_header
    %s8 = sphi 0, %s12
    %p9 = scmp.ge.s32.totalorder %s8, 4
    %s18 = sphi 0, %s20
    %s21 = sphi 0, %s18
    %s22 = sphi 0, %s21
    %s38 = sphi 0, %s22
    %s42 = sphi 0, %s42
    %s44 = sphi 0, %s42
    %s45 = sphi 0, %s44
    %s59 = sphi 0, %s45
    %s65 = sphi 0, %s67
    %s68 = sphi 0, %s65
    %s69 = sphi 0, %s68
    %s85 = sphi 0, %s69
  $region4: #{avg_pool2d_2x2.1} parent=0 // loop_header_branch
    %11 = sbr.rel (%p9) target = $region8
  $region5: #{avg_pool2d_2x2.1} parent=0 // loop_body
    %s13 = ssub.s32 %s8, 1
    %s14 = ssub.s32 %s8, 2
    %s15 = sadd.s32 %s8, 1
    %s16 = ssub.s32 %s8, %s15
    %p17 = scmp.eq.s32.totalorder %s16, 0
    %s19 = sadd.s32 %s18, 1
    %s20 = scalar_select %p17, %s18, %s19
    %p23 = pneg %p17
    %p24 = scmp.eq.s32.totalorder %s8, 1
    %p25 = por %p23, %p24
    %p26 = scmp.ne.s32.totalorder %s18, %s21
    %p27 = scmp.eq.s32.totalorder %s8, 0
    %p28 = por %p26, %p27
    %p29 = scmp.ne.s32.totalorder %s18, %s21
    %p30 = scmp.eq.s32.totalorder %s13, 1
    %p31 = por %p29, %p30
    %p32 = scmp.ne.s32.totalorder %s21, %s22
    %p33 = scmp.eq.s32.totalorder %s13, 0
    %p34 = por %p32, %p33
    %p35 = scmp.ne.s32.totalorder %s21, %s22
    %p36 = scmp.eq.s32.totalorder %s14, 1
    %p37 = por %p35, %p36
    %p39 = scmp.ne.s32.totalorder %s22, %s38
    %p40 = scmp.eq.s32.totalorder %s14, 0
    %p41 = por %p39, %p40
    %s43 = sadd.s32 %s42, 1
    %p46 = scmp.eq.s32.totalorder %s8, 1
    %p47 = scmp.ne.s32.totalorder %s42, %s44
    %p48 = scmp.eq.s32.totalorder %s8, 0
    %p49 = por %p47, %p48
    %p50 = scmp.ne.s32.totalorder %s42, %s44
    %p51 = scmp.eq.s32.totalorder %s13, 1
    %p52 = por %p50, %p51
    %p53 = scmp.ne.s32.totalorder %s44, %s45
    %p54 = scmp.eq.s32.totalorder %s13, 0
    %p55 = por %p53, %p54
    %p56 = scmp.ne.s32.totalorder %s44, %s45
    %p57 = scmp.eq.s32.totalorder %s14, 1
    %p58 = por %p56, %p57
    %p60 = scmp.ne.s32.totalorder %s45, %s59
    %p61 = scmp.eq.s32.totalorder %s14, 0
    %p62 = por %p60, %p61
    %s63 = ssub.s32 %s8, %s15
    %p64 = scmp.eq.s32.totalorder %s63, 0
    %s66 = sadd.s32 %s65, 1
    %s67 = scalar_select %p64, %s65, %s66
    %p70 = pneg %p64
    %p71 = scmp.eq.s32.totalorder %s8, 1
    %p72 = por %p70, %p71
    %p73 = scmp.ne.s32.totalorder %s65, %s68
    %p74 = scmp.eq.s32.totalorder %s8, 0
    %p75 = por %p73, %p74
    %p76 = scmp.ne.s32.totalorder %s65, %s68
    %p77 = scmp.eq.s32.totalorder %s13, 1
    %p78 = por %p76, %p77
    %p79 = scmp.ne.s32.totalorder %s68, %s69
    %p80 = scmp.eq.s32.totalorder %s13, 0
    %p81 = por %p79, %p80
    %p82 = scmp.ne.s32.totalorder %s68, %s69
    %p83 = scmp.eq.s32.totalorder %s14, 1
    %p84 = por %p82, %p83
    %p86 = scmp.ne.s32.totalorder %s69, %s85
    %p87 = scmp.eq.s32.totalorder %s14, 0
    %p88 = por %p86, %p87
    %p89 = scmp.le.s32.totalorder 1, %s8
    %p90 = scmp.lt.s32.totalorder %s8, 3
    %p91 = pnand %p89, %p90
    %p92 = pneg %p91
    // Predicated region
    $region9: #{avg_pool2d_2x2.1} parent=5 // pred_check
      _
    $region10: #{avg_pool2d_2x2.1} parent=5 // pred_check_branch
      %94 = sbr.rel (%p91) target = $region12
    $region11: #{avg_pool2d_2x2.1} parent=5 // pred_region
      %s95 = ssub.s32 %s8, 1
      // Predicated region
      $region13: #{avg_pool2d_2x2.1} parent=11 // pred_check
        %p96 = pneg %p55
      $region14: #{avg_pool2d_2x2.1} parent=11 // pred_check_branch
        %98 = sbr.rel (%p96) target = $region16
      $region15: #{avg_pool2d_2x2.1} parent=11 // pred_region
        _
      $region16: #{avg_pool2d_2x2.1} parent=11 // pred_fallthru
        _
    $region12: #{avg_pool2d_2x2.1} parent=5 // pred_fallthru
      _
    %p99 = scmp.lt.s32.totalorder %s8, 2
    // Predicated region
    $region17: #{avg_pool2d_2x2.1} parent=5 // pred_check
      %p100 = pneg %p99
    $region18: #{avg_pool2d_2x2.1} parent=5 // pred_check_branch
      %102 = sbr.rel (%p100) target = $region20
    $region19: #{avg_pool2d_2x2.1} parent=5 // pred_region
      // Predicated region
      $region21: #{avg_pool2d_2x2.1} parent=19 // pred_check
        %p103 = pneg %p28
      $region22: #{avg_pool2d_2x2.1} parent=19 // pred_check_branch
        %105 = sbr.rel (%p103) target = $region24
      $region23: #{avg_pool2d_2x2.1} parent=19 // pred_region
        %s106 = smul.u32 56, %s8
        %p107 = scmp.lt.s32.totalorder %s106, 111
        %s108 = scalar_select %p107, %s106, 111
        %s109 = smul.addr %s108, 2
        %s110 = smul.addr %s109, 8
        %s111 = scalar_lea.vmem %s0, %s110
        %s112 = smul.u32 56, %s8
      $region24: #{avg_pool2d_2x2.1} parent=19 // pred_fallthru
        _
    $region20: #{avg_pool2d_2x2.1} parent=5 // pred_fallthru
      _
    %p113 = scmp.le.s32.totalorder 1, %s8
    %p114 = scmp.lt.s32.totalorder %s8, 3
    %p115 = pnand %p113, %p114
    %p116 = pneg %p115
    // Predicated region
    $region25: #{avg_pool2d_2x2.1} parent=5 // pred_check
      _
    $region26: #{avg_pool2d_2x2.1} parent=5 // pred_check_branch
      %118 = sbr.rel (%p115) target = $region28
    $region27: #{avg_pool2d_2x2.1} parent=5 // pred_region
      %s119 = ssub.s32 %s8, 1
      %s120 = smul.u32 56, %s13
      %p121 = scmp.lt.s32.totalorder %s120, 111
      %s122 = scalar_select %p121, %s120, 111
      %s123 = smul.addr %s122, 2
      %s124 = smul.addr %s123, 8
      %s125 = scalar_lea.vmem %s0, %s124
      %p126 = pneg %p34
      %p127 = pneg %p31
      %p128 = pneg %p55
      %p129 = pneg %p52
      %p130 = pneg %p81
      %p131 = pneg %p78
      %s132 = smul.u32 56, %s13
      %p133 = scmp.lt.s32.totalorder %s132, 111
      %s134 = scalar_select %p133, %s132, 111
      %s135 = smul.addr %s134, 8
      %s136 = scalar_lea.vmem %s2, %s135
      %s137 = smul.u32 56, %s13
      %p138 = scmp.lt.s32.totalorder %s137, 111
      %s139 = scalar_select %p138, %s137, 111
      %s140 = smul.addr %s139, 2
      %s141 = smul.addr %s140, 8
      %s142 = scalar_lea.vmem %s0, %s141
      %s143 = smul.u32 56, %s13
      %s144 = smul.u32 56, %s13
      %p145 = scmp.lt.s32.totalorder %s144, 111
      %s146 = scalar_select %p145, %s144, 111
      %s147 = smul.addr %s146, 8
      %s148 = scalar_lea.vmem %s2, %s147
      %s149 = smul.u32 56, %s13
      %v150 = vld [vmem:[%s142] sm:$0xff]
      %v151 = vld [vmem:[%s142 + $0x8] sm:$0xff]
      %v152 = vld [vmem:[%s142 + $0x10] sm:$0xff]
      %v153 = vld [vmem:[%s142 + $0x18] sm:$0xff]
      %v154 = vld [vmem:[%s142 + $0x20] sm:$0xff]
      %v155 = vld [vmem:[%s142 + $0x28] sm:$0xff]
      %v156 = vld [vmem:[%s142 + $0x30] sm:$0xff]
      %v157 = vld [vmem:[%s142 + $0x38] sm:$0xff]
      %v158 = vld [vmem:[%s142 + $0x40] sm:$0xff]
      %v159 = vld [vmem:[%s142 + $0x48] sm:$0xff]
      %v160 = vld [vmem:[%s142 + $0x50] sm:$0xff]
      %v161 = vld [vmem:[%s142 + $0x58] sm:$0xff]
      %v162 = vld [vmem:[%s142 + $0x60] sm:$0xff]
      %v163 = vld [vmem:[%s142 + $0x68] sm:$0xff]
      %v164 = vld [vmem:[%s142 + $0x70] sm:$0xff]
      %v165 = vld [vmem:[%s142 + $0x78] sm:$0xff]
      %v166 = vld [vmem:[%s142 + $0x80] sm:$0xff]
      %v167 = vld [vmem:[%s142 + $0x88] sm:$0xff]
      %v168 = vld [vmem:[%s142 + $0x90] sm:$0xff]
      %v169 = vld [vmem:[%s142 + $0x98] sm:$0xff]
      %v170 = vld [vmem:[%s142 + $0xa0] sm:$0xff]
      %v171 = vld [vmem:[%s142 + $0xa8] sm:$0xff]
      %v172 = vld [vmem:[%s142 + $0xb0] sm:$0xff]
      %v173 = vld [vmem:[%s142 + $0xb8] sm:$0xff]
      %v174 = vld [vmem:[%s142 + $0xc0] sm:$0xff]
      %v175 = vld [vmem:[%s142 + $0xc8] sm:$0xff]
      %v176 = vld [vmem:[%s142 + $0xd0] sm:$0xff]
      %v177 = vld [vmem:[%s142 + $0xd8] sm:$0xff]
      %v178 = vld [vmem:[%s142 + $0xe0] sm:$0xff]
      %v179 = vld [vmem:[%s142 + $0xe8] sm:$0xff]
      %v180 = vld [vmem:[%s142 + $0xf0] sm:$0xff]
      %v181 = vld [vmem:[%s142 + $0xf8] sm:$0xff]
      %v182 = vld [vmem:[%s142 + $0x100] sm:$0xff]
      %v183 = vld [vmem:[%s142 + $0x108] sm:$0xff]
      %v184 = vld [vmem:[%s142 + $0x110] sm:$0xff]
      %v185 = vld [vmem:[%s142 + $0x118] sm:$0xff]
      %v186 = vld [vmem:[%s142 + $0x120] sm:$0xff]
      %v187 = vld [vmem:[%s142 + $0x128] sm:$0xff]
      %v188 = vld [vmem:[%s142 + $0x130] sm:$0xff]
      %v189 = vld [vmem:[%s142 + $0x138] sm:$0xff]
      %v190 = vld [vmem:[%s142 + $0x140] sm:$0xff]
      %v191 = vld [vmem:[%s142 + $0x148] sm:$0xff]
      %v192 = vld [vmem:[%s142 + $0x150] sm:$0xff]
      %v193 = vld [vmem:[%s142 + $0x158] sm:$0xff]
      %v194 = vld [vmem:[%s142 + $0x160] sm:$0xff]
      %v195 = vld [vmem:[%s142 + $0x168] sm:$0xff]
      %v196 = vld [vmem:[%s142 + $0x170] sm:$0xff]
      %v197 = vld [vmem:[%s142 + $0x178] sm:$0xff]
      %v198 = vld [vmem:[%s142 + $0x180] sm:$0xff]
      %v199 = vld [vmem:[%s142 + $0x188] sm:$0xff]
      %v200 = vld [vmem:[%s142 + $0x190] sm:$0xff]
      %v201 = vld [vmem:[%s142 + $0x198] sm:$0xff]
      %v202 = vld [vmem:[%s142 + $0x1a0] sm:$0xff]
      %v203 = vld [vmem:[%s142 + $0x1a8] sm:$0xff]
      %v204 = vld [vmem:[%s142 + $0x1b0] sm:$0xff]
      %v205 = vld [vmem:[%s142 + $0x1b8] sm:$0xff]
      %v206 = vld [vmem:[%s142 + $0x1c0] sm:$0xff]
      %v207 = vld [vmem:[%s142 + $0x1c8] sm:$0xff]
      %v208 = vld [vmem:[%s142 + $0x1d0] sm:$0xff]
      %v209 = vld [vmem:[%s142 + $0x1d8] sm:$0xff]
      %v210 = vld [vmem:[%s142 + $0x1e0] sm:$0xff]
      %v211 = vld [vmem:[%s142 + $0x1e8] sm:$0xff]
      %v212 = vld [vmem:[%s142 + $0x1f0] sm:$0xff]
      %v213 = vld [vmem:[%s142 + $0x1f8] sm:$0xff]
      %v214 = vld [vmem:[%s142 + $0x200] sm:$0xff]
      %v215 = vld [vmem:[%s142 + $0x208] sm:$0xff]
      %v216 = vld [vmem:[%s142 + $0x210] sm:$0xff]
      %v217 = vld [vmem:[%s142 + $0x218] sm:$0xff]
      %v218 = vld [vmem:[%s142 + $0x220] sm:$0xff]
      %v219 = vld [vmem:[%s142 + $0x228] sm:$0xff]
      %v220 = vld [vmem:[%s142 + $0x230] sm:$0xff]
      %v221 = vld [vmem:[%s142 + $0x238] sm:$0xff]
      %v222 = vld [vmem:[%s142 + $0x240] sm:$0xff]
      %v223 = vld [vmem:[%s142 + $0x248] sm:$0xff]
      %v224 = vld [vmem:[%s142 + $0x250] sm:$0xff]
      %v225 = vld [vmem:[%s142 + $0x258] sm:$0xff]
      %v226 = vld [vmem:[%s142 + $0x260] sm:$0xff]
      %v227 = vld [vmem:[%s142 + $0x268] sm:$0xff]
      %v228 = vld [vmem:[%s142 + $0x270] sm:$0xff]
      %v229 = vld [vmem:[%s142 + $0x278] sm:$0xff]
      %v230 = vld [vmem:[%s142 + $0x280] sm:$0xff]
      %v231 = vld [vmem:[%s142 + $0x288] sm:$0xff]
      %v232 = vld [vmem:[%s142 + $0x290] sm:$0xff]
      %v233 = vld [vmem:[%s142 + $0x298] sm:$0xff]
      %v234 = vld [vmem:[%s142 + $0x2a0] sm:$0xff]
      %v235 = vld [vmem:[%s142 + $0x2a8] sm:$0xff]
      %v236 = vld [vmem:[%s142 + $0x2b0] sm:$0xff]
      %v237 = vld [vmem:[%s142 + $0x2b8] sm:$0xff]
      %v238 = vld [vmem:[%s142 + $0x2c0] sm:$0xff]
      %v239 = vld [vmem:[%s142 + $0x2c8] sm:$0xff]
      %v240 = vld [vmem:[%s142 + $0x2d0] sm:$0xff]
      %v241 = vld [vmem:[%s142 + $0x2d8] sm:$0xff]
      %v242 = vld [vmem:[%s142 + $0x2e0] sm:$0xff]
      %v243 = vld [vmem:[%s142 + $0x2e8] sm:$0xff]
      %v244 = vld [vmem:[%s142 + $0x2f0] sm:$0xff]
      %v245 = vld [vmem:[%s142 + $0x2f8] sm:$0xff]
      %v246 = vld [vmem:[%s142 + $0x300] sm:$0xff]
      %v247 = vld [vmem:[%s142 + $0x308] sm:$0xff]
      %v248 = vld [vmem:[%s142 + $0x310] sm:$0xff]
      %v249 = vld [vmem:[%s142 + $0x318] sm:$0xff]
      %v250 = vld [vmem:[%s142 + $0x320] sm:$0xff]
      %v251 = vld [vmem:[%s142 + $0x328] sm:$0xff]
      %v252 = vld [vmem:[%s142 + $0x330] sm:$0xff]
      %v253 = vld [vmem:[%s142 + $0x338] sm:$0xff]
      %v254 = vld [vmem:[%s142 + $0x340] sm:$0xff]
      %v255 = vld [vmem:[%s142 + $0x348] sm:$0xff]
      %v256 = vld [vmem:[%s142 + $0x350] sm:$0xff]
      %v257 = vld [vmem:[%s142 + $0x358] sm:$0xff]
      %v258 = vld [vmem:[%s142 + $0x360] sm:$0xff]
      %v259 = vld [vmem:[%s142 + $0x368] sm:$0xff]
      %v260 = vld [vmem:[%s142 + $0x370] sm:$0xff]
      %v261 = vld [vmem:[%s142 + $0x378] sm:$0xff]
      %v262 = vld [vmem:[%s1] sm:$0xff]
      %v263 = vld [vmem:[%s1 + $0x8] sm:$0xff]
      %v264 = vld [vmem:[%s1 + $0x10] sm:$0xff]
      %v265 = vld [vmem:[%s1 + $0x18] sm:$0xff]
      %v266 = vld [vmem:[%s1 + $0x20] sm:$0xff]
      %v267 = vld [vmem:[%s1 + $0x28] sm:$0xff]
      %v268 = vld [vmem:[%s1 + $0x30] sm:$0xff]
      %v269 = vld [vmem:[%s1 + $0x38] sm:$0xff]
      %v270 = vld [vmem:[%s1 + $0x40] sm:$0xff]
      %v271 = vld [vmem:[%s1 + $0x48] sm:$0xff]
      %v272 = vld [vmem:[%s1 + $0x50] sm:$0xff]
      %v273 = vld [vmem:[%s1 + $0x58] sm:$0xff]
      %v274 = vld [vmem:[%s1 + $0x60] sm:$0xff]
      %v275 = vld [vmem:[%s1 + $0x68] sm:$0xff]
      %v276 = vld [vmem:[%s1 + $0x70] sm:$0xff]
      %v277 = vld [vmem:[%s1 + $0x78] sm:$0xff]
      %v278 = vld [vmem:[%s1 + $0x80] sm:$0xff]
      %v279 = vld [vmem:[%s1 + $0x88] sm:$0xff]
      %v280 = vld [vmem:[%s1 + $0x90] sm:$0xff]
      %v281 = vld [vmem:[%s1 + $0x98] sm:$0xff]
      %v282 = vld [vmem:[%s1 + $0xa0] sm:$0xff]
      %v283 = vld [vmem:[%s1 + $0xa8] sm:$0xff]
      %v284 = vld [vmem:[%s1 + $0xb0] sm:$0xff]
      %v285 = vld [vmem:[%s1 + $0xb8] sm:$0xff]
      %v286 = vld [vmem:[%s1 + $0xc0] sm:$0xf]
      %vm287 = vcmask 556032
      %v289 = vsel %vm287, %v151, 0
      %v292 = vsel %vm287, %v153, 0
      %v295 = vsel %vm287, %v155, 0
      %v298 = vsel %vm287, %v157, 0
      %v301 = vsel %vm287, %v159, 0
      %v304 = vsel %vm287, %v161, 0
      %v307 = vsel %vm287, %v163, 0
      %v310 = vsel %vm287, %v165, 0
      %v313 = vsel %vm287, %v167, 0
      %v316 = vsel %vm287, %v169, 0
      %v319 = vsel %vm287, %v171, 0
      %v322 = vsel %vm287, %v173, 0
      %v325 = vsel %vm287, %v175, 0
      %v328 = vsel %vm287, %v177, 0
      %v331 = vsel %vm287, %v179, 0
      %v334 = vsel %vm287, %v181, 0
      %v337 = vsel %vm287, %v183, 0
      %v340 = vsel %vm287, %v185, 0
      %v343 = vsel %vm287, %v187, 0
      %v346 = vsel %vm287, %v189, 0
      %v349 = vsel %vm287, %v191, 0
      %v352 = vsel %vm287, %v193, 0
      %v355 = vsel %vm287, %v195, 0
      %v358 = vsel %vm287, %v197, 0
      %v361 = vsel %vm287, %v199, 0
      %v364 = vsel %vm287, %v201, 0
      %v367 = vsel %vm287, %v203, 0
      %v370 = vsel %vm287, %v205, 0
      %v373 = vsel %vm287, %v207, 0
      %v376 = vsel %vm287, %v209, 0
      %v379 = vsel %vm287, %v211, 0
      %v382 = vsel %vm287, %v213, 0
      %v385 = vsel %vm287, %v215, 0
      %v388 = vsel %vm287, %v217, 0
      %v391 = vsel %vm287, %v219, 0
      %v394 = vsel %vm287, %v221, 0
      %v397 = vsel %vm287, %v223, 0
      %v400 = vsel %vm287, %v225, 0
      %v403 = vsel %vm287, %v227, 0
      %v406 = vsel %vm287, %v229, 0
      %v409 = vsel %vm287, %v231, 0
      %v412 = vsel %vm287, %v233, 0
      %v415 = vsel %vm287, %v235, 0
      %v418 = vsel %vm287, %v237, 0
      %v421 = vsel %vm287, %v239, 0
      %v424 = vsel %vm287, %v241, 0
      %v427 = vsel %vm287, %v243, 0
      %v430 = vsel %vm287, %v245, 0
      %v433 = vsel %vm287, %v247, 0
      %v436 = vsel %vm287, %v249, 0
      %v439 = vsel %vm287, %v251, 0
      %v442 = vsel %vm287, %v253, 0
      %v445 = vsel %vm287, %v255, 0
      %v448 = vsel %vm287, %v257, 0
      %v451 = vsel %vm287, %v259, 0
      %v454 = vsel %vm287, %v261, 0
      %vm456 = vcmask 1043456
      %v458 = vsel %vm456, %v286, 0
      %460 = vmatprep.subr.mxu0 0.0
      %461 = vmatpush1.msra.mxu0 %v277
      %462 = vmatprep.subr.mxu0 0.0
      %463 = vmatpush1.msra.mxu0 %v276
      %464 = vmatprep.subr.mxu0 0.0
      %465 = vmatpush1.msra.mxu0 %v275
      %466 = vmatprep.subr.mxu0 0.0
      %467 = vmatpush1.msra.mxu0 %v274
      %468 = vmatprep.subr.mxu0 0.0
      %469 = vmatpush1.msra.mxu0 %v273
      %470 = vmatprep.subr.mxu0 0.0
      %471 = vmatpush1.msra.mxu0 %v272
      %472 = vmatprep.subr.mxu0 0.0
      %473 = vmatpush1.msra.mxu0 %v271
      %474 = vmatprep.subr.mxu0 0.0
      %475 = vmatpush1.msra.mxu0 %v270
      %476 = vmatprep.subr.mxu0 0.0
      %477 = vmatpush1.msra.mxu0 %v269
      %478 = vmatprep.subr.mxu0 0.0
      %479 = vmatpush1.msra.mxu0 %v268
      %480 = vmatprep.subr.mxu0 0.0
      %481 = vmatpush1.msra.mxu0 %v267
      %482 = vmatprep.subr.mxu0 0.0
      %483 = vmatpush1.msra.mxu0 %v266
      %484 = vmatprep.subr.mxu0 0.0
      %485 = vmatpush1.msra.mxu0 %v265
      %486 = vmatprep.subr.mxu0 0.0
      %487 = vmatpush1.msra.mxu0 %v264
      %488 = vmatprep.subr.mxu0 0.0
      %489 = vmatpush1.msra.mxu0 %v263
      %490 = vmatprep.subr.mxu0 0.0
      %491 = vmatpush1.msra.mxu0 %v262
      %492 = vmatprep.subr.mxu0 0.0
      %493 = vmatpush2.msra.mxu0 0.0
      %494 = vmatprep.subr.mxu0 0.0
      %495 = vmatpush2.msra.mxu0 0.0
      %496 = vmatprep.subr.mxu0 0.0
      %497 = vmatpush2.msra.mxu0 0.0
      %498 = vmatprep.subr.mxu0 0.0
      %499 = vmatpush2.msra.mxu0 0.0
      %500 = vmatprep.subr.mxu0 0.0
      %501 = vmatpush2.msra.mxu0 0.0
      %502 = vmatprep.subr.mxu0 0.0
      %503 = vmatpush2.msra.mxu0 0.0
      %504 = vmatprep.subr.mxu0 0.0
      %505 = vmatpush2.msra.mxu0 0.0
      %506 = vmatprep.subr.mxu0 0.0
      %507 = vmatpush2.msra.mxu0 %v458
      %508 = vmatprep.subr.mxu0 0.0
      %509 = vmatpush2.msra.mxu0 %v285
      %510 = vmatprep.subr.mxu0 0.0
      %511 = vmatpush2.msra.mxu0 %v284
      %512 = vmatprep.subr.mxu0 0.0
      %513 = vmatpush2.msra.mxu0 %v283
      %514 = vmatprep.subr.mxu0 0.0
      %515 = vmatpush2.msra.mxu0 %v282
      %516 = vmatprep.subr.mxu0 0.0
      %517 = vmatpush2.msra.mxu0 %v281
      %518 = vmatprep.subr.mxu0 0.0
      %519 = vmatpush2.msra.mxu0 %v280
      %520 = vmatprep.subr.mxu0 0.0
      %521 = vmatpush2.msra.mxu0 %v279
      %522 = vmatprep.subr.mxu0 0.0
      %523 = vmatpush2.msra.mxu0 %v278
      %524 = vmatprep.mubr.f32.mxu0 %v289
      %525 = vmatmul.mubr.f32.gmra.mxu0 %v150
      %v526 = vpop.f32.mrf.mxu0
      %v527 = vadd.f32 0.0, %v526
      %v528 = vpop.f32.mrf.mxu0
      %529 = vmatprep.mubr.f32.mxu0 %v292
      %530 = vmatmul.mubr.f32.gmra.mxu0 %v152
      %v531 = vpop.f32.mrf.mxu0
      %v532 = vadd.f32 0.0, %v531
      %v533 = vpop.f32.mrf.mxu0
      %534 = vmatprep.mubr.f32.mxu0 %v295
      %535 = vmatmul.mubr.f32.gmra.mxu0 %v154
      %v536 = vpop.f32.mrf.mxu0
      %v537 = vadd.f32 0.0, %v536
      %v538 = vpop.f32.mrf.mxu0
      %539 = vmatprep.mubr.f32.mxu0 %v298
      %540 = vmatmul.mubr.f32.gmra.mxu0 %v156
      %v541 = vpop.f32.mrf.mxu0
      %v542 = vadd.f32 0.0, %v541
      %v543 = vpop.f32.mrf.mxu0
      %544 = vmatprep.mubr.f32.mxu0 %v301
      %545 = vmatmul.mubr.f32.gmra.mxu0 %v158
      %v546 = vpop.f32.mrf.mxu0
      %v547 = vadd.f32 0.0, %v546
      %v548 = vpop.f32.mrf.mxu0
      %549 = vmatprep.mubr.f32.mxu0 %v304
      %550 = vmatmul.mubr.f32.gmra.mxu0 %v160
      %v551 = vpop.f32.mrf.mxu0
      %v552 = vadd.f32 0.0, %v551
      %v553 = vpop.f32.mrf.mxu0
      %554 = vmatprep.mubr.f32.mxu0 %v307
      %555 = vmatmul.mubr.f32.gmra.mxu0 %v162
      %v556 = vpop.f32.mrf.mxu0
      %v557 = vadd.f32 0.0, %v556
      %v558 = vpop.f32.mrf.mxu0
      %559 = vmatprep.mubr.f32.mxu0 %v310
      %560 = vmatmul.mubr.f32.gmra.mxu0 %v164
      %v561 = vpop.f32.mrf.mxu0
      %v562 = vadd.f32 0.0, %v561
      %v563 = vpop.f32.mrf.mxu0
      %564 = vmatprep.mubr.f32.mxu0 %v313
      %565 = vmatmul.mubr.f32.gmra.mxu0 %v166
      %v566 = vpop.f32.mrf.mxu0
      %v567 = vadd.f32 0.0, %v566
      %v568 = vpop.f32.mrf.mxu0
      %569 = vmatprep.mubr.f32.mxu0 %v316
      %570 = vmatmul.mubr.f32.gmra.mxu0 %v168
      %v571 = vpop.f32.mrf.mxu0
      %v572 = vadd.f32 0.0, %v571
      %v573 = vpop.f32.mrf.mxu0
      %574 = vmatprep.mubr.f32.mxu0 %v319
      %575 = vmatmul.mubr.f32.gmra.mxu0 %v170
      %v576 = vpop.f32.mrf.mxu0
      %v577 = vadd.f32 0.0, %v576
      %v578 = vpop.f32.mrf.mxu0
      %579 = vmatprep.mubr.f32.mxu0 %v322
      %580 = vmatmul.mubr.f32.gmra.mxu0 %v172
      %v581 = vpop.f32.mrf.mxu0
      %v582 = vadd.f32 0.0, %v581
      %v583 = vpop.f32.mrf.mxu0
      %584 = vmatprep.mubr.f32.mxu0 %v325
      %585 = vmatmul.mubr.f32.gmra.mxu0 %v174
      %v586 = vpop.f32.mrf.mxu0
      %v587 = vadd.f32 0.0, %v586
      %v588 = vpop.f32.mrf.mxu0
      %589 = vmatprep.mubr.f32.mxu0 %v328
      %590 = vmatmul.mubr.f32.gmra.mxu0 %v176
      %v591 = vpop.f32.mrf.mxu0
      %v592 = vadd.f32 0.0, %v591
      %v593 = vpop.f32.mrf.mxu0
      %594 = vmatprep.mubr.f32.mxu0 %v331
      %595 = vmatmul.mubr.f32.gmra.mxu0 %v178
      %v596 = vpop.f32.mrf.mxu0
      %v597 = vadd.f32 0.0, %v596
      %v598 = vpop.f32.mrf.mxu0
      %599 = vmatprep.mubr.f32.mxu0 %v334
      %600 = vmatmul.mubr.f32.gmra.mxu0 %v180
      %v601 = vpop.f32.mrf.mxu0
      %v602 = vadd.f32 0.0, %v601
      %v603 = vpop.f32.mrf.mxu0
      %604 = vmatprep.mubr.f32.mxu0 %v337
      %605 = vmatmul.mubr.f32.gmra.mxu0 %v182
      %v606 = vpop.f32.mrf.mxu0
      %v607 = vadd.f32 0.0, %v606
      %v608 = vpop.f32.mrf.mxu0
      %609 = vmatprep.mubr.f32.mxu0 %v340
      %610 = vmatmul.mubr.f32.gmra.mxu0 %v184
      %v611 = vpop.f32.mrf.mxu0
      %v612 = vadd.f32 0.0, %v611
      %v613 = vpop.f32.mrf.mxu0
      %614 = vmatprep.mubr.f32.mxu0 %v343
      %615 = vmatmul.mubr.f32.gmra.mxu0 %v186
      %v616 = vpop.f32.mrf.mxu0
      %v617 = vadd.f32 0.0, %v616
      %v618 = vpop.f32.mrf.mxu0
      %619 = vmatprep.mubr.f32.mxu0 %v346
      %620 = vmatmul.mubr.f32.gmra.mxu0 %v188
      %v621 = vpop.f32.mrf.mxu0
      %v622 = vadd.f32 0.0, %v621
      %v623 = vpop.f32.mrf.mxu0
      %624 = vmatprep.mubr.f32.mxu0 %v349
      %625 = vmatmul.mubr.f32.gmra.mxu0 %v190
      %v626 = vpop.f32.mrf.mxu0
      %v627 = vadd.f32 0.0, %v626
      %v628 = vpop.f32.mrf.mxu0
      %629 = vmatprep.mubr.f32.mxu0 %v352
      %630 = vmatmul.mubr.f32.gmra.mxu0 %v192
      %v631 = vpop.f32.mrf.mxu0
      %v632 = vadd.f32 0.0, %v631
      %v633 = vpop.f32.mrf.mxu0
      %634 = vmatprep.mubr.f32.mxu0 %v355
      %635 = vmatmul.mubr.f32.gmra.mxu0 %v194
      %v636 = vpop.f32.mrf.mxu0
      %v637 = vadd.f32 0.0, %v636
      %v638 = vpop.f32.mrf.mxu0
      %639 = vmatprep.mubr.f32.mxu0 %v358
      %640 = vmatmul.mubr.f32.gmra.mxu0 %v196
      %v641 = vpop.f32.mrf.mxu0
      %v642 = vadd.f32 0.0, %v641
      %v643 = vpop.f32.mrf.mxu0
      %644 = vmatprep.mubr.f32.mxu0 %v361
      %645 = vmatmul.mubr.f32.gmra.mxu0 %v198
      %v646 = vpop.f32.mrf.mxu0
      %v647 = vadd.f32 0.0, %v646
      %v648 = vpop.f32.mrf.mxu0
      %649 = vmatprep.mubr.f32.mxu0 %v364
      %650 = vmatmul.mubr.f32.gmra.mxu0 %v200
      %v651 = vpop.f32.mrf.mxu0
      %v652 = vadd.f32 0.0, %v651
      %v653 = vpop.f32.mrf.mxu0
      %654 = vmatprep.mubr.f32.mxu0 %v367
      %655 = vmatmul.mubr.f32.gmra.mxu0 %v202
      %v656 = vpop.f32.mrf.mxu0
      %v657 = vadd.f32 0.0, %v656
      %v658 = vpop.f32.mrf.mxu0
      %659 = vmatprep.mubr.f32.mxu0 %v370
      %660 = vmatmul.mubr.f32.gmra.mxu0 %v204
      %v661 = vpop.f32.mrf.mxu0
      %v662 = vadd.f32 0.0, %v661
      %v663 = vpop.f32.mrf.mxu0
      %664 = vmatprep.mubr.f32.mxu0 %v373
      %665 = vmatmul.mubr.f32.gmra.mxu0 %v206
      %v666 = vpop.f32.mrf.mxu0
      %v667 = vadd.f32 0.0, %v666
      %v668 = vpop.f32.mrf.mxu0
      %669 = vmatprep.mubr.f32.mxu0 %v376
      %670 = vmatmul.mubr.f32.gmra.mxu0 %v208
      %v671 = vpop.f32.mrf.mxu0
      %v672 = vadd.f32 0.0, %v671
      %v673 = vpop.f32.mrf.mxu0
      %674 = vmatprep.mubr.f32.mxu0 %v379
      %675 = vmatmul.mubr.f32.gmra.mxu0 %v210
      %v676 = vpop.f32.mrf.mxu0
      %v677 = vadd.f32 0.0, %v676
      %v678 = vpop.f32.mrf.mxu0
      %679 = vmatprep.mubr.f32.mxu0 %v382
      %680 = vmatmul.mubr.f32.gmra.mxu0 %v212
      %v681 = vpop.f32.mrf.mxu0
      %v682 = vadd.f32 0.0, %v681
      %v683 = vpop.f32.mrf.mxu0
      %684 = vmatprep.mubr.f32.mxu0 %v385
      %685 = vmatmul.mubr.f32.gmra.mxu0 %v214
      %v686 = vpop.f32.mrf.mxu0
      %v687 = vadd.f32 0.0, %v686
      %v688 = vpop.f32.mrf.mxu0
      %689 = vmatprep.mubr.f32.mxu0 %v388
      %690 = vmatmul.mubr.f32.gmra.mxu0 %v216
      %v691 = vpop.f32.mrf.mxu0
      %v692 = vadd.f32 0.0, %v691
      %v693 = vpop.f32.mrf.mxu0
      %694 = vmatprep.mubr.f32.mxu0 %v391
      %695 = vmatmul.mubr.f32.gmra.mxu0 %v218
      %v696 = vpop.f32.mrf.mxu0
      %v697 = vadd.f32 0.0, %v696
      %v698 = vpop.f32.mrf.mxu0
      %699 = vmatprep.mubr.f32.mxu0 %v394
      %700 = vmatmul.mubr.f32.gmra.mxu0 %v220
      %v701 = vpop.f32.mrf.mxu0
      %v702 = vadd.f32 0.0, %v701
      %v703 = vpop.f32.mrf.mxu0
      %704 = vmatprep.mubr.f32.mxu0 %v397
      %705 = vmatmul.mubr.f32.gmra.mxu0 %v222
      %v706 = vpop.f32.mrf.mxu0
      %v707 = vadd.f32 0.0, %v706
      %v708 = vpop.f32.mrf.mxu0
      %709 = vmatprep.mubr.f32.mxu0 %v400
      %710 = vmatmul.mubr.f32.gmra.mxu0 %v224
      %v711 = vpop.f32.mrf.mxu0
      %v712 = vadd.f32 0.0, %v711
      %v713 = vpop.f32.mrf.mxu0
      %714 = vmatprep.mubr.f32.mxu0 %v403
      %715 = vmatmul.mubr.f32.gmra.mxu0 %v226
      %v716 = vpop.f32.mrf.mxu0
      %v717 = vadd.f32 0.0, %v716
      %v718 = vpop.f32.mrf.mxu0
      %719 = vmatprep.mubr.f32.mxu0 %v406
      %720 = vmatmul.mubr.f32.gmra.mxu0 %v228
      %v721 = vpop.f32.mrf.mxu0
      %v722 = vadd.f32 0.0, %v721
      %v723 = vpop.f32.mrf.mxu0
      %724 = vmatprep.mubr.f32.mxu0 %v409
      %725 = vmatmul.mubr.f32.gmra.mxu0 %v230
      %v726 = vpop.f32.mrf.mxu0
      %v727 = vadd.f32 0.0, %v726
      %v728 = vpop.f32.mrf.mxu0
      %729 = vmatprep.mubr.f32.mxu0 %v412
      %730 = vmatmul.mubr.f32.gmra.mxu0 %v232
      %v731 = vpop.f32.mrf.mxu0
      %v732 = vadd.f32 0.0, %v731
      %v733 = vpop.f32.mrf.mxu0
      %734 = vmatprep.mubr.f32.mxu0 %v415
      %735 = vmatmul.mubr.f32.gmra.mxu0 %v234
      %v736 = vpop.f32.mrf.mxu0
      %v737 = vadd.f32 0.0, %v736
      %v738 = vpop.f32.mrf.mxu0
      %739 = vmatprep.mubr.f32.mxu0 %v418
      %740 = vmatmul.mubr.f32.gmra.mxu0 %v236
      %v741 = vpop.f32.mrf.mxu0
      %v742 = vadd.f32 0.0, %v741
      %v743 = vpop.f32.mrf.mxu0
      %744 = vmatprep.mubr.f32.mxu0 %v421
      %745 = vmatmul.mubr.f32.gmra.mxu0 %v238
      %v746 = vpop.f32.mrf.mxu0
      %v747 = vadd.f32 0.0, %v746
      %v748 = vpop.f32.mrf.mxu0
      %749 = vmatprep.mubr.f32.mxu0 %v424
      %750 = vmatmul.mubr.f32.gmra.mxu0 %v240
      %v751 = vpop.f32.mrf.mxu0
      %v752 = vadd.f32 0.0, %v751
      %v753 = vpop.f32.mrf.mxu0
      %754 = vmatprep.mubr.f32.mxu0 %v427
      %755 = vmatmul.mubr.f32.gmra.mxu0 %v242
      %v756 = vpop.f32.mrf.mxu0
      %v757 = vadd.f32 0.0, %v756
      %v758 = vpop.f32.mrf.mxu0
      %759 = vmatprep.mubr.f32.mxu0 %v430
      %760 = vmatmul.mubr.f32.gmra.mxu0 %v244
      %v761 = vpop.f32.mrf.mxu0
      %v762 = vadd.f32 0.0, %v761
      %v763 = vpop.f32.mrf.mxu0
      %764 = vmatprep.mubr.f32.mxu0 %v433
      %765 = vmatmul.mubr.f32.gmra.mxu0 %v246
      %v766 = vpop.f32.mrf.mxu0
      %v767 = vadd.f32 0.0, %v766
      %v768 = vpop.f32.mrf.mxu0
      %769 = vmatprep.mubr.f32.mxu0 %v436
      %770 = vmatmul.mubr.f32.gmra.mxu0 %v248
      %v771 = vpop.f32.mrf.mxu0
      %v772 = vadd.f32 0.0, %v771
      %v773 = vpop.f32.mrf.mxu0
      %774 = vmatprep.mubr.f32.mxu0 %v439
      %775 = vmatmul.mubr.f32.gmra.mxu0 %v250
      %v776 = vpop.f32.mrf.mxu0
      %v777 = vadd.f32 0.0, %v776
      %v778 = vpop.f32.mrf.mxu0
      %779 = vmatprep.mubr.f32.mxu0 %v442
      %780 = vmatmul.mubr.f32.gmra.mxu0 %v252
      %v781 = vpop.f32.mrf.mxu0
      %v782 = vadd.f32 0.0, %v781
      %v783 = vpop.f32.mrf.mxu0
      %784 = vmatprep.mubr.f32.mxu0 %v445
      %785 = vmatmul.mubr.f32.gmra.mxu0 %v254
      %v786 = vpop.f32.mrf.mxu0
      %v787 = vadd.f32 0.0, %v786
      %v788 = vpop.f32.mrf.mxu0
      %789 = vmatprep.mubr.f32.mxu0 %v448
      %790 = vmatmul.mubr.f32.gmra.mxu0 %v256
      %v791 = vpop.f32.mrf.mxu0
      %v792 = vadd.f32 0.0, %v791
      %v793 = vpop.f32.mrf.mxu0
      %794 = vmatprep.mubr.f32.mxu0 %v451
      %795 = vmatmul.mubr.f32.gmra.mxu0 %v258
      %v796 = vpop.f32.mrf.mxu0
      %v797 = vadd.f32 0.0, %v796
      %v798 = vpop.f32.mrf.mxu0
      %799 = vmatprep.mubr.f32.mxu0 %v454
      %800 = vmatmul.mubr.f32.gmra.mxu0 %v260
      %v801 = vpop.f32.mrf.mxu0
      %v802 = vadd.f32 0.0, %v801
      %v803 = vpop.f32.mrf.mxu0
      %804 = vdwg.mxu0
      %vm805 = vcmask 400384
      %806 = vst.msk [vmem:[%s148] sm:$0xff] %vm805, %v527
      %807 = vst.msk [vmem:[%s148 + $0x8] sm:$0xff] %vm805, %v532
      %808 = vst.msk [vmem:[%s148 + $0x10] sm:$0xff] %vm805, %v537
      %809 = vst.msk [vmem:[%s148 + $0x18] sm:$0xff] %vm805, %v542
      %810 = vst.msk [vmem:[%s148 + $0x20] sm:$0xff] %vm805, %v547
      %811 = vst.msk [vmem:[%s148 + $0x28] sm:$0xff] %vm805, %v552
      %812 = vst.msk [vmem:[%s148 + $0x30] sm:$0xff] %vm805, %v557
      %813 = vst.msk [vmem:[%s148 + $0x38] sm:$0xff] %vm805, %v562
      %814 = vst.msk [vmem:[%s148 + $0x40] sm:$0xff] %vm805, %v567
      %815 = vst.msk [vmem:[%s148 + $0x48] sm:$0xff] %vm805, %v572
      %816 = vst.msk [vmem:[%s148 + $0x50] sm:$0xff] %vm805, %v577
      %817 = vst.msk [vmem:[%s148 + $0x58] sm:$0xff] %vm805, %v582
      %818 = vst.msk [vmem:[%s148 + $0x60] sm:$0xff] %vm805, %v587
      %819 = vst.msk [vmem:[%s148 + $0x68] sm:$0xff] %vm805, %v592
      %820 = vst.msk [vmem:[%s148 + $0x70] sm:$0xff] %vm805, %v597
      %821 = vst.msk [vmem:[%s148 + $0x78] sm:$0xff] %vm805, %v602
      %822 = vst.msk [vmem:[%s148 + $0x80] sm:$0xff] %vm805, %v607
      %823 = vst.msk [vmem:[%s148 + $0x88] sm:$0xff] %vm805, %v612
      %824 = vst.msk [vmem:[%s148 + $0x90] sm:$0xff] %vm805, %v617
      %825 = vst.msk [vmem:[%s148 + $0x98] sm:$0xff] %vm805, %v622
      %826 = vst.msk [vmem:[%s148 + $0xa0] sm:$0xff] %vm805, %v627
      %827 = vst.msk [vmem:[%s148 + $0xa8] sm:$0xff] %vm805, %v632
      %828 = vst.msk [vmem:[%s148 + $0xb0] sm:$0xff] %vm805, %v637
      %829 = vst.msk [vmem:[%s148 + $0xb8] sm:$0xff] %vm805, %v642
      %830 = vst.msk [vmem:[%s148 + $0xc0] sm:$0xff] %vm805, %v647
      %831 = vst.msk [vmem:[%s148 + $0xc8] sm:$0xff] %vm805, %v652
      %832 = vst.msk [vmem:[%s148 + $0xd0] sm:$0xff] %vm805, %v657
      %833 = vst.msk [vmem:[%s148 + $0xd8] sm:$0xff] %vm805, %v662
      %834 = vst.msk [vmem:[%s148 + $0xe0] sm:$0xff] %vm805, %v667
      %835 = vst.msk [vmem:[%s148 + $0xe8] sm:$0xff] %vm805, %v672
      %836 = vst.msk [vmem:[%s148 + $0xf0] sm:$0xff] %vm805, %v677
      %837 = vst.msk [vmem:[%s148 + $0xf8] sm:$0xff] %vm805, %v682
      %838 = vst.msk [vmem:[%s148 + $0x100] sm:$0xff] %vm805, %v687
      %839 = vst.msk [vmem:[%s148 + $0x108] sm:$0xff] %vm805, %v692
      %840 = vst.msk [vmem:[%s148 + $0x110] sm:$0xff] %vm805, %v697
      %841 = vst.msk [vmem:[%s148 + $0x118] sm:$0xff] %vm805, %v702
      %842 = vst.msk [vmem:[%s148 + $0x120] sm:$0xff] %vm805, %v707
      %843 = vst.msk [vmem:[%s148 + $0x128] sm:$0xff] %vm805, %v712
      %844 = vst.msk [vmem:[%s148 + $0x130] sm:$0xff] %vm805, %v717
      %845 = vst.msk [vmem:[%s148 + $0x138] sm:$0xff] %vm805, %v722
      %846 = vst.msk [vmem:[%s148 + $0x140] sm:$0xff] %vm805, %v727
      %847 = vst.msk [vmem:[%s148 + $0x148] sm:$0xff] %vm805, %v732
      %848 = vst.msk [vmem:[%s148 + $0x150] sm:$0xff] %vm805, %v737
      %849 = vst.msk [vmem:[%s148 + $0x158] sm:$0xff] %vm805, %v742
      %850 = vst.msk [vmem:[%s148 + $0x160] sm:$0xff] %vm805, %v747
      %851 = vst.msk [vmem:[%s148 + $0x168] sm:$0xff] %vm805, %v752
      %852 = vst.msk [vmem:[%s148 + $0x170] sm:$0xff] %vm805, %v757
      %853 = vst.msk [vmem:[%s148 + $0x178] sm:$0xff] %vm805, %v762
      %854 = vst.msk [vmem:[%s148 + $0x180] sm:$0xff] %vm805, %v767
      %855 = vst.msk [vmem:[%s148 + $0x188] sm:$0xff] %vm805, %v772
      %856 = vst.msk [vmem:[%s148 + $0x190] sm:$0xff] %vm805, %v777
      %857 = vst.msk [vmem:[%s148 + $0x198] sm:$0xff] %vm805, %v782
      %858 = vst.msk [vmem:[%s148 + $0x1a0] sm:$0xff] %vm805, %v787
      %859 = vst.msk [vmem:[%s148 + $0x1a8] sm:$0xff] %vm805, %v792
      %860 = vst.msk [vmem:[%s148 + $0x1b0] sm:$0xff] %vm805, %v797
      %861 = vst.msk [vmem:[%s148 + $0x1b8] sm:$0xff] %vm805, %v802
      %s862 = smul.u32 56, %s13
      %p863 = scmp.lt.s32.totalorder %s862, 111
      %s864 = scalar_select %p863, %s862, 111
      %s865 = smul.addr %s864, 8
      %s866 = scalar_lea.vmem %s2, %s865
      // Predicated region
      $region29: #{avg_pool2d_2x2.1} parent=27 // pred_check
        %p867 = pneg %p78
      $region30: #{avg_pool2d_2x2.1} parent=27 // pred_check_branch
        %869 = sbr.rel (%p867) target = $region32
      $region31: #{avg_pool2d_2x2.1} parent=27 // pred_region
        %s870 = smul.u32 56, %s13
      $region32: #{avg_pool2d_2x2.1} parent=27 // pred_fallthru
        _
    $region28: #{avg_pool2d_2x2.1} parent=5 // pred_fallthru
      _
    %p871 = scmp.le.s32.totalorder 2, %s8
    // Predicated region
    $region33: #{avg_pool2d_2x2.1} parent=5 // pred_check
      %p872 = pneg %p871
    $region34: #{avg_pool2d_2x2.1} parent=5 // pred_check_branch
      %874 = sbr.rel (%p872) target = $region36
    $region35: #{avg_pool2d_2x2.1} parent=5 // pred_region
      %s875 = ssub.s32 %s8, 2
      // Predicated region
      $region37: #{avg_pool2d_2x2.1} parent=35 // pred_check
        %p876 = pneg %p84
      $region38: #{avg_pool2d_2x2.1} parent=35 // pred_check_branch
        %878 = sbr.rel (%p876) target = $region40
      $region39: #{avg_pool2d_2x2.1} parent=35 // pred_region
        %s879 = smul.u32 56, %s14
        %p880 = scmp.lt.s32.totalorder %s879, 111
        %s881 = scalar_select %p880, %s879, 111
        %s882 = smul.addr %s881, 8
        %s883 = scalar_lea.vmem %s2, %s882
      $region40: #{avg_pool2d_2x2.1} parent=35 // pred_fallthru
        _
    $region36: #{avg_pool2d_2x2.1} parent=5 // pred_fallthru
      _
  $region6: #{avg_pool2d_2x2.1} parent=0 // loop_footer
    %s12 = sadd.s32 1, %s8
  $region7: #{avg_pool2d_2x2.1} parent=0 // loop_footer_branch
    %7 = sbr.rel target = $region3
  $region8: #{avg_pool2d_2x2.1} parent=0 // loop_exit
    _

</llo_original>
